<compile_context>
chip_gen: v7x
topology: tpu7x:2x2x1
jax: 0.10.0
libtpu: 0.0.40
codegen_flags: <defaults>
</compile_context>

<pallas_src>
import functools

import jax
import jax.numpy as jnp
from jax.experimental import pallas as pl
from jax.experimental.pallas import tpu as pltpu


def _fused_max_kernel(x2_ref, x3_ref, x4_ref, x5_ref, o_ref, acc_ref):
    # x2_ref : (Bb, E, SB2)  spatial tile of the level-2 selected channels.
    # x3..x5 : (Bb, E, N_l)  fully-resident selected channels (index_map is
    #                        constant over the spatial axis -> DMA'd once per
    #                        batch block, not re-fetched per step).
    # o_ref  : (Bb, 4*E)     lane-dense packed output (written on last step).
    # acc_ref: (Bb, E)       running max for the gridded level-2 reduction.
    s = pl.program_id(1)

    @pl.when(s == 0)
    def _init():
        acc_ref[...] = jnp.full(acc_ref.shape, -jnp.inf, dtype=acc_ref.dtype)

    # Cross-lane (XLU) max over the spatial tile; XLU has plenty of slack in
    # this HBM-bandwidth-bound regime.
    acc_ref[...] = jnp.maximum(acc_ref[...], jnp.max(x2_ref[...], axis=-1))

    @pl.when(s == pl.num_programs(1) - 1)
    def _finalize():
        m2 = acc_ref[...]
        m3 = jnp.max(x3_ref[...], axis=-1)
        m4 = jnp.max(x4_ref[...], axis=-1)
        m5 = jnp.max(x5_ref[...], axis=-1)
        # Single lane-dense (Bb, 4E) store; the concat is free filler under DMA.
        o_ref[...] = jnp.concatenate([m2, m3, m4, m5], axis=-1).astype(o_ref.dtype)


def _prep_level(x, embed_dim):
    """(B, C, H, W) -> ((B, E, L) array, N=H*W). Selected channels' data
    occupies the first N columns of each row; native dtype throughout."""
    b, c, h, w = x.shape
    n = h * w
    if c % embed_dim == 0 and n % 128 == 0:
        # Zero-copy path: free row-major reshape; channel e*(C/E)'s data is the
        # first N columns of row e, so the kernel DMA reads only those bytes.
        return x.reshape(b, embed_dim, (c // embed_dim) * n), n
    if c % embed_dim == 0:
        # Static strided slice (no gather, no transpose, no cast).
        return x.reshape(b, c, n)[:, :: c // embed_dim, :], n
    # General fallback: PyTorch legacy 'nearest' index floor(e*C/E).
    # TODO(synk): fold this into an in-kernel strided/gather DMA (pl.ANY +
    # make_async_copy) to avoid the wrapper-side materialization.
    idx = (jnp.arange(embed_dim) * c) // embed_dim
    return x.reshape(b, c, n)[:, idx, :], n


def _pick_spatial_block(n, cap):
    """Largest multiple of 128 that divides n and is <= cap; else n (full)."""
    if n <= cap:
        return n
    k = cap - cap % 128
    while k >= 128:
        if n % k == 0:
            return k
        k -= 128
    # TODO(synk): no multiple-of-128 divisor <= cap; fall back to the full
    # extent (correct, larger VMEM block) instead of adding edge masking.
    return n


@functools.partial(jax.jit, static_argnames=("embed_dim",))
def visual_base_multi_packed(c2, c3, c4, c5, *, embed_dim):
    assert c2.dtype == c3.dtype == c4.dtype == c5.dtype
    dtype = c2.dtype
    b = c2.shape[0]
    e = embed_dim

    (g2, n2), (g3, n3), (g4, n4), (g5, n5) = (
        _prep_level(x, e) for x in (c2, c3, c4, c5)
    )

    itemsize = jnp.dtype(dtype).itemsize
    # Batch block: 8 keeps the output's second-to-last block dim a multiple of
    # 8 and gives the "parallel" axis >1 steps for v7x megacore when possible.
    b_blk = 8 if (b % 8 == 0 and b > 8) else b

    # Level-2 spatial block: >=512 where possible, capped so the
    # double-buffered c2 window stays in the low-MiB range (safe on v7x's
    # 64 MiB physical VMEM and under v5e's 16 MiB / v6e's 32 MiB scoped
    # defaults, which we also raise explicitly below).
    c2_buf_budget = 8 << 20
    cap = max(512, c2_buf_budget // max(1, b_blk * e * itemsize))
    sb2 = _pick_spatial_block(n2, cap)
    n_spatial_steps = n2 // sb2

    # VMEM estimate: double-buffered inputs + output + accumulator (+ headroom).
    est = 2 * b_blk * e * (sb2 + n3 + n4 + n5) * itemsize
    est += 2 * b_blk * 4 * e * itemsize + b_blk * e * 4
    vmem_limit = int(min(2 * est + (4 << 20), 56 << 20))

    total_sel_elems = b * e * (n2 + n3 + n4 + n5)
    cost = pl.CostEstimate(
        flops=total_sel_elems,  # one compare per selected element
        transcendentals=0,
        bytes_accessed=total_sel_elems * itemsize + b * 4 * e * itemsize,
    )

    out = pl.pallas_call(
        _fused_max_kernel,
        out_shape=jax.ShapeDtypeStruct((b, 4 * e), dtype),
        grid_spec=pltpu.PrefetchScalarGridSpec(
            num_scalar_prefetch=0,
            grid=(b // b_blk, n_spatial_steps),
            in_specs=[
                pl.BlockSpec((b_blk, e, sb2), lambda bi, si: (bi, 0, si)),
                pl.BlockSpec((b_blk, e, n3), lambda bi, si: (bi, 0, 0)),
                pl.BlockSpec((b_blk, e, n4), lambda bi, si: (bi, 0, 0)),
                pl.BlockSpec((b_blk, e, n5), lambda bi, si: (bi, 0, 0)),
            ],
            out_specs=pl.BlockSpec((b_blk, 4 * e), lambda bi, si: (bi, 0)),
            scratch_shapes=[pltpu.VMEM((b_blk, e), dtype)],
        ),
        compiler_params=pltpu.CompilerParams(
            dimension_semantics=("parallel", "arbitrary"),
            vmem_limit_bytes=vmem_limit,
        ),
        cost_estimate=cost,
    )(g2, g3, g4, g5)
    return out


def visual_base_multi(features, embed_dim: int):
    """features: [c2, c3, c4, c5] NCHW pyramid (channels 64/128/256/512).
    Returns a list of four (B, embed_dim) arrays (module semantics).
    Prefer `visual_base_multi_packed` if the consumer can take (B, 4E)."""
    c2, c3, c4, c5 = features
    packed = visual_base_multi_packed(c2, c3, c4, c5, embed_dim=embed_dim)
    e = embed_dim
    return [packed[:, i * e:(i + 1) * e] for i in range(4)]


def _reference_level(x: jnp.ndarray, embed_dim: int) -> jnp.ndarray:
    # Pure-JAX reference of the PyTorch semantics.
    b, c, h, w = x.shape
    idx = (jnp.arange(embed_dim) * c) // embed_dim
    m = jnp.max(x.reshape(b, c, -1), axis=-1)
    return m[:, idx]


if __name__ == "__main__":
    EMBED_DIM = 32
    B = 2
    key = jax.random.PRNGKey(0)
    k2, k3, k4, k5 = jax.random.split(key, 4)

    # Small FPN-style feature pyramid (NCHW, channels 64/128/256/512).
    c2 = jax.random.normal(k2, (B, 64, 16, 16), dtype=jnp.float32)
    c3 = jax.random.normal(k3, (B, 128, 8, 8), dtype=jnp.float32)
    c4 = jax.random.normal(k4, (B, 256, 4, 4), dtype=jnp.float32)
    c5 = jax.random.normal(k5, (B, 512, 2, 2), dtype=jnp.float32)
    feats = [c2, c3, c4, c5]

    outs = [jax.block_until_ready(o) for o in visual_base_multi(feats, EMBED_DIM)]
    for o, f in zip(outs, feats):
        ref = _reference_level(f, EMBED_DIM)
        assert o.shape == (B, EMBED_DIM) and o.dtype == f.dtype
        assert jnp.array_equal(o, ref)  # gather + max are exact selections

    # Native-dtype (bf16) path: max is a pure selection, so results are exact.
    feats_bf16 = [f.astype(jnp.bfloat16) for f in feats]
    outs_bf16 = [jax.block_until_ready(o)
                 for o in visual_base_multi(feats_bf16, EMBED_DIM)]
    for o, f in zip(outs_bf16, feats_bf16):
        assert o.dtype == jnp.bfloat16
        assert jnp.array_equal(o, _reference_level(f, EMBED_DIM))

    print("KERNEL_OK")
</pallas_src>

<mosaic_0001>
module attributes {stable_mosaic.version = 11 : i64} {
  func.func @_fused_max_kernel(%arg0: i32, %arg1: i32, %arg2: memref<2x32x256xf32, #tpu.memory_space<vmem>>, %arg3: memref<2x32x64xf32, #tpu.memory_space<vmem>>, %arg4: memref<2x32x16xf32, #tpu.memory_space<vmem>>, %arg5: memref<2x32x4xf32, #tpu.memory_space<vmem>>, %arg6: memref<2x128xf32, #tpu.memory_space<vmem>>, %arg7: memref<2x32xf32, #tpu.memory_space<vmem>>) attributes {dimension_semantics = [#tpu.dimension_semantics<parallel>, #tpu.dimension_semantics<arbitrary>], iteration_bounds = array<i64: 1, 1>, scalar_prefetch = 0 : i64, scratch_operands = 1 : i64, tpu.core_type = #tpu.core_type<tc>, window_params = [{transform_indices = @transform_0, window_bounds = array<i64: 2, 32, 256>}, {transform_indices = @transform_1, window_bounds = array<i64: 2, 32, 64>}, {transform_indices = @transform_2, window_bounds = array<i64: 2, 32, 16>}, {transform_indices = @transform_3, window_bounds = array<i64: 2, 32, 4>}, {transform_indices = @transform_4, window_bounds = array<i64: 2, 128>}]} {
    %c0_i32 = arith.constant 0 : i32
    %0 = arith.cmpi eq, %arg1, %c0_i32 : i32
    %1 = arith.extui %0 : i1 to i32
    %c0_i32_0 = arith.constant 0 : i32
    %2 = arith.cmpi ne, %1, %c0_i32_0 : i32
    scf.if %2 {
      %cst_9 = arith.constant 0xFF800000 : f32
      %11 = vector.broadcast %cst_9 : f32 to vector<2x32xf32>
      %c0_10 = arith.constant 0 : index
      %c0_11 = arith.constant 0 : index
      %12 = vector.load %arg7[%c0_10, %c0_11] : memref<2x32xf32, #tpu.memory_space<vmem>>, vector<2x32xf32>
      tpu.vector_store %arg7[%c0_10, %c0_11], %11 {strides = array<i32>} : memref<2x32xf32, #tpu.memory_space<vmem>>, vector<2x32xf32>,
    } else {
    }
    %c0 = arith.constant 0 : index
    %c0_1 = arith.constant 0 : index
    %3 = vector.load %arg7[%c0, %c0_1] : memref<2x32xf32, #tpu.memory_space<vmem>>, vector<2x32xf32>
    %c0_2 = arith.constant 0 : index
    %c0_3 = arith.constant 0 : index
    %c0_4 = arith.constant 0 : index
    %4 = vector.load %arg2[%c0_2, %c0_3, %c0_4] : memref<2x32x256xf32, #tpu.memory_space<vmem>>, vector<2x32x256xf32>
    %cst = arith.constant dense<0xFF800000> : vector<2x32xf32>
    %5 = vector.multi_reduction <maximumf>, %4, %cst [2] : vector<2x32x256xf32> to vector<2x32xf32>
    %6 = arith.maximumf %3, %5 : vector<2x32xf32>
    %c0_5 = arith.constant 0 : index
    %c0_6 = arith.constant 0 : index
    %7 = vector.load %arg7[%c0_5, %c0_6] : memref<2x32xf32, #tpu.memory_space<vmem>>, vector<2x32xf32>
    tpu.vector_store %arg7[%c0_5, %c0_6], %6 {strides = array<i32>} : memref<2x32xf32, #tpu.memory_space<vmem>>, vector<2x32xf32>,
    %c0_i32_7 = arith.constant 0 : i32
    %8 = arith.cmpi eq, %arg1, %c0_i32_7 : i32
    %9 = arith.extui %8 : i1 to i32
    %c0_i32_8 = arith.constant 0 : i32
    %10 = arith.cmpi ne, %9, %c0_i32_8 : i32
    scf.if %10 {
      %c0_9 = arith.constant 0 : index
      %c0_10 = arith.constant 0 : index
      %11 = vector.load %arg7[%c0_9, %c0_10] : memref<2x32xf32, #tpu.memory_space<vmem>>, vector<2x32xf32>
      %c0_11 = arith.constant 0 : index
      %c0_12 = arith.constant 0 : index
      %c0_13 = arith.constant 0 : index
      %12 = vector.load %arg3[%c0_11, %c0_12, %c0_13] : memref<2x32x64xf32, #tpu.memory_space<vmem>>, vector<2x32x64xf32>
      %cst_14 = arith.constant dense<0xFF800000> : vector<2x32xf32>
      %13 = vector.multi_reduction <maximumf>, %12, %cst_14 [2] : vector<2x32x64xf32> to vector<2x32xf32>
      %c0_15 = arith.constant 0 : index
      %c0_16 = arith.constant 0 : index
      %c0_17 = arith.constant 0 : index
      %14 = vector.load %arg4[%c0_15, %c0_16, %c0_17] : memref<2x32x16xf32, #tpu.memory_space<vmem>>, vector<2x32x16xf32>
      %cst_18 = arith.constant dense<0xFF800000> : vector<2x32xf32>
      %15 = vector.multi_reduction <maximumf>, %14, %cst_18 [2] : vector<2x32x16xf32> to vector<2x32xf32>
      %c0_19 = arith.constant 0 : index
      %c0_20 = arith.constant 0 : index
      %c0_21 = arith.constant 0 : index
      %16 = vector.load %arg5[%c0_19, %c0_20, %c0_21] : memref<2x32x4xf32, #tpu.memory_space<vmem>>, vector<2x32x4xf32>
      %cst_22 = arith.constant dense<0xFF800000> : vector<2x32xf32>
      %17 = vector.multi_reduction <maximumf>, %16, %cst_22 [2] : vector<2x32x4xf32> to vector<2x32xf32>
      %18 = tpu.concatenate %11, %13, %15, %17 in 1 : vector<2x32xf32>, vector<2x32xf32>, vector<2x32xf32>, vector<2x32xf32> -> vector<2x128xf32>
      %c0_23 = arith.constant 0 : index
      %c0_24 = arith.constant 0 : index
      %19 = vector.load %arg6[%c0_23, %c0_24] : memref<2x128xf32, #tpu.memory_space<vmem>>, vector<2x128xf32>
      tpu.vector_store %arg6[%c0_23, %c0_24], %18 {strides = array<i32>} : memref<2x128xf32, #tpu.memory_space<vmem>>, vector<2x128xf32>,
    } else {
    }
    return
  }
  func.func @transform_0(%arg0: i32, %arg1: i32) -> (i32, i32, i32) {
    %c0_i32 = arith.constant 0 : i32
    %c0_i32_0 = arith.constant 0 : i32
    return %arg0, %c0_i32, %arg1 : i32, i32, i32
  }
  func.func @transform_1(%arg0: i32, %arg1: i32) -> (i32, i32, i32) {
    %c0_i32 = arith.constant 0 : i32
    %c0_i32_0 = arith.constant 0 : i32
    %c0_i32_1 = arith.constant 0 : i32
    return %arg0, %c0_i32, %c0_i32_0 : i32, i32, i32
  }
  func.func @transform_2(%arg0: i32, %arg1: i32) -> (i32, i32, i32) {
    %c0_i32 = arith.constant 0 : i32
    %c0_i32_0 = arith.constant 0 : i32
    %c0_i32_1 = arith.constant 0 : i32
    return %arg0, %c0_i32, %c0_i32_0 : i32, i32, i32
  }
  func.func @transform_3(%arg0: i32, %arg1: i32) -> (i32, i32, i32) {
    %c0_i32 = arith.constant 0 : i32
    %c0_i32_0 = arith.constant 0 : i32
    %c0_i32_1 = arith.constant 0 : i32
    return %arg0, %c0_i32, %c0_i32_0 : i32, i32, i32
  }
  func.func @transform_4(%arg0: i32, %arg1: i32) -> (i32, i32) {
    %c0_i32 = arith.constant 0 : i32
    %c0_i32_0 = arith.constant 0 : i32
    return %arg0, %c0_i32 : i32, i32
  }
}

</mosaic_0001>

<llo_original>
// kernel: visual_base_multi_packed.1
$region0: #{visual_base_multi_packed.1}
  #allocation0 [shape = 'u32[]', space=smem, size = 0x4, offset = 0x4, fixed_abs, tag = 'smem constant byte address 0x4 - core index']
  #allocation1 [shape = 'u32[144,128]{1,0:T(1,128)}', space=vmem, size = 0x12000, scoped, tag = 'internal scratch']
  #allocation2 [shape = 'f32[2,32]{1,0:T(2,128)}', space=vmem, size = 0x400, scoped, tag = 'scratch operand']
  %s0 = inlined_call_operand.vmem [shape: f32[2,32,512], index: 0, kind: input, shape index: {}]
  %s1 = inlined_call_operand.vmem [shape: f32[2,32,64], index: 1, kind: input, shape index: {}]
  %s2 = inlined_call_operand.vmem [shape: f32[2,32,16], index: 2, kind: input, shape index: {}]
  %s3 = inlined_call_operand.vmem [shape: f32[2,32,4], index: 3, kind: input, shape index: {}]
  %s4 = inlined_call_operand.hbm [shape: f32[2,128], index: 4, kind: output, shape index: {}]
  %s5 = sld [smem:[#allocation0]]
  $region57: #{visual_base_multi_packed.1} parent=0
    _
  %s7 = ssub.s32 1, %s5
  %s8 = scalar_select 0, %s7, %s5
  $region1: #{visual_base_multi_packed.1} parent=0
    #allocation3 [shape = 'u8[65536]{0}', space=vmem, size = 0x10000, scoped, tag = 'input window, operand 0, single buffered']
    #allocation4 [shape = 'u8[1024]{0}', space=vmem, size = 0x400, scoped, tag = 'output window, operand 0, single buffered']
    #allocation5 [shape = 's32[1]{0}', space=sflag, size = 0x4, scoped, tag = 'scoped memory for visual_base_multi_packed.1']
    %9 = vsyncpa [#allocation5], 0
    // Predicated region
    $region2: #{visual_base_multi_packed.1} parent=1 // pred_check
      _
    $region3: #{visual_base_multi_packed.1} parent=1 // pred_check_branch
      %11 = sbr.rel (0) target = $region5
    $region4: #{visual_base_multi_packed.1} parent=1 // pred_region
      // Predicated region
      $region6: #{visual_base_multi_packed.1} parent=4 // pred_check
        _
      $region7: #{visual_base_multi_packed.1} parent=4 // pred_check_branch
        %13 = sbr.rel (0) target = $region9
      $region8: #{visual_base_multi_packed.1} parent=4 // pred_region
        // Predicated region
        $region10: #{visual_base_multi_packed.1} parent=8 // pred_check
          _
        $region11: #{visual_base_multi_packed.1} parent=8 // pred_check_branch
          %15 = sbr.rel (0) target = $region13
        $region12: #{visual_base_multi_packed.1} parent=8 // pred_region
          loop: start=0, step=1, limit=1
          $region14: #{visual_base_multi_packed.1} parent=12 // loop_pre_header
            _
          $region15: #{visual_base_multi_packed.1} parent=12 // loop_header
            %s17 = sphi 0, %s21
            %p18 = scmp.ge.s32.totalorder %s17, 1
            %s22 = sphi %s0, %s0
            %s23 = sphi [#allocation3], [#allocation3]
          $region16: #{visual_base_multi_packed.1} parent=12 // loop_header_branch
            %20 = sbr.rel (%p18) target = $region20
          $region17: #{visual_base_multi_packed.1} parent=12 // loop_body
            %v24 = vld [vmem:[%s22] sm:$0xff]
            %25 = vst [vmem:[%s23] sm:$0xff] %v24
            %v26 = vld [vmem:[%s22 + $0x8] sm:$0xff]
            %27 = vst [vmem:[%s23 + $0x8] sm:$0xff] %v26
            %v28 = vld [vmem:[%s22 + $0x20] sm:$0xff]
            %29 = vst [vmem:[%s23 + $0x10] sm:$0xff] %v28
            %v30 = vld [vmem:[%s22 + $0x28] sm:$0xff]
            %31 = vst [vmem:[%s23 + $0x18] sm:$0xff] %v30
            %v32 = vld [vmem:[%s22 + $0x40] sm:$0xff]
            %33 = vst [vmem:[%s23 + $0x20] sm:$0xff] %v32
            %v34 = vld [vmem:[%s22 + $0x48] sm:$0xff]
            %35 = vst [vmem:[%s23 + $0x28] sm:$0xff] %v34
            %v36 = vld [vmem:[%s22 + $0x60] sm:$0xff]
            %37 = vst [vmem:[%s23 + $0x30] sm:$0xff] %v36
            %v38 = vld [vmem:[%s22 + $0x68] sm:$0xff]
            %39 = vst [vmem:[%s23 + $0x38] sm:$0xff] %v38
            %v40 = vld [vmem:[%s22 + $0x80] sm:$0xff]
            %41 = vst [vmem:[%s23 + $0x40] sm:$0xff] %v40
            %v42 = vld [vmem:[%s22 + $0x88] sm:$0xff]
            %43 = vst [vmem:[%s23 + $0x48] sm:$0xff] %v42
            %v44 = vld [vmem:[%s22 + $0xa0] sm:$0xff]
            %45 = vst [vmem:[%s23 + $0x50] sm:$0xff] %v44
            %v46 = vld [vmem:[%s22 + $0xa8] sm:$0xff]
            %47 = vst [vmem:[%s23 + $0x58] sm:$0xff] %v46
            %v48 = vld [vmem:[%s22 + $0xc0] sm:$0xff]
            %49 = vst [vmem:[%s23 + $0x60] sm:$0xff] %v48
            %v50 = vld [vmem:[%s22 + $0xc8] sm:$0xff]
            %51 = vst [vmem:[%s23 + $0x68] sm:$0xff] %v50
            %v52 = vld [vmem:[%s22 + $0xe0] sm:$0xff]
            %53 = vst [vmem:[%s23 + $0x70] sm:$0xff] %v52
            %v54 = vld [vmem:[%s22 + $0xe8] sm:$0xff]
            %55 = vst [vmem:[%s23 + $0x78] sm:$0xff] %v54
          $region18: #{visual_base_multi_packed.1} parent=12 // loop_footer
            %s21 = sadd.s32 1, %s17
          $region19: #{visual_base_multi_packed.1} parent=12 // loop_footer_branch
            %16 = sbr.rel target = $region15
          $region20: #{visual_base_multi_packed.1} parent=12 // loop_exit
            _
        $region13: #{visual_base_multi_packed.1} parent=8 // pred_fallthru
          _
        // Predicated region
        $region21: #{visual_base_multi_packed.1} parent=8 // pred_check
          _
        $region22: #{visual_base_multi_packed.1} parent=8 // pred_check_branch
          %57 = sbr.rel target = $region24
        $region23: #{visual_base_multi_packed.1} parent=8 // pred_region
          _
        $region24: #{visual_base_multi_packed.1} parent=8 // pred_fallthru
          _
      $region9: #{visual_base_multi_packed.1} parent=4 // pred_fallthru
        _
      %58 = vnop
    $region5: #{visual_base_multi_packed.1} parent=1 // pred_fallthru
      _
    // Predicated region
    $region25: #{visual_base_multi_packed.1} parent=1 // pred_check
      _
    $region26: #{visual_base_multi_packed.1} parent=1 // pred_check_branch
      %60 = sbr.rel (0) target = $region28
    $region27: #{visual_base_multi_packed.1} parent=1 // pred_region
      _
    $region28: #{visual_base_multi_packed.1} parent=1 // pred_fallthru
      _
    // Predicated region
    $region29: #{visual_base_multi_packed.1} parent=1 // pred_check
      _
    $region30: #{visual_base_multi_packed.1} parent=1 // pred_check_branch
      %62 = sbr.rel (0) target = $region32
    $region31: #{visual_base_multi_packed.1} parent=1 // pred_region
      _
    $region32: #{visual_base_multi_packed.1} parent=1 // pred_fallthru
      _
    // Predicated region
    $region33: #{visual_base_multi_packed.1} parent=1 // pred_check
      _
    $region34: #{visual_base_multi_packed.1} parent=1 // pred_check_branch
      %64 = sbr.rel (0) target = $region36
    $region35: #{visual_base_multi_packed.1} parent=1 // pred_region
      _
    $region36: #{visual_base_multi_packed.1} parent=1 // pred_fallthru
      _
    // Predicated region
    $region37: #{visual_base_multi_packed.1} parent=1 // pred_check
      _
    $region38: #{visual_base_multi_packed.1} parent=1 // pred_check_branch
      %66 = sbr.rel (0) target = $region40
    $region39: #{visual_base_multi_packed.1} parent=1 // pred_region
      _
    $region40: #{visual_base_multi_packed.1} parent=1 // pred_fallthru
      _
    %p67 = scmp.eq.s32.totalorder 0, 0
    // Predicated region
    $region41: #{visual_base_multi_packed.1} parent=1 // pred_check
      %p68 = pneg %p67
    $region42: #{visual_base_multi_packed.1} parent=1 // pred_check_branch
      %70 = sbr.rel (%p68) target = $region44
    $region43: #{visual_base_multi_packed.1} parent=1 // pred_region
      %vm71 = vcmask 254976
      %72 = vst.msk [vmem:[#allocation2] sm:$0x3] %vm71, -inf
    $region44: #{visual_base_multi_packed.1} parent=1 // pred_fallthru
      _
    %v73 = vld [vmem:[#allocation2] sm:$0x3]
    %v74 = vld [vmem:[#allocation3] sm:$0xff]
    %v75 = vld [vmem:[#allocation3 + $0x8] sm:$0xff]
    %v76 = vld [vmem:[#allocation3 + $0x10] sm:$0xff]
    %v77 = vld [vmem:[#allocation3 + $0x18] sm:$0xff]
    %v78 = vld [vmem:[#allocation3 + $0x20] sm:$0xff]
    %v79 = vld [vmem:[#allocation3 + $0x28] sm:$0xff]
    %v80 = vld [vmem:[#allocation3 + $0x30] sm:$0xff]
    %v81 = vld [vmem:[#allocation3 + $0x38] sm:$0xff]
    %v82 = vld [vmem:[#allocation3 + $0x40] sm:$0xff]
    %v83 = vld [vmem:[#allocation3 + $0x48] sm:$0xff]
    %v84 = vld [vmem:[#allocation3 + $0x50] sm:$0xff]
    %v85 = vld [vmem:[#allocation3 + $0x58] sm:$0xff]
    %v86 = vld [vmem:[#allocation3 + $0x60] sm:$0xff]
    %v87 = vld [vmem:[#allocation3 + $0x68] sm:$0xff]
    %v88 = vld [vmem:[#allocation3 + $0x70] sm:$0xff]
    %v89 = vld [vmem:[#allocation3 + $0x78] sm:$0xff]
    %v90 = vmax.f32 %v74, %v75
    %91 = vmax.xlane.f32.xlu0 %v90
    %v92 = vpop.xlane.xlu0 %91
    %v93 = vmax.f32 %v76, %v77
    %94 = vmax.xlane.f32.xlu0 %v93
    %v95 = vpop.xlane.xlu0 %94
    %v96 = vmax.f32 %v78, %v79
    %97 = vmax.xlane.f32.xlu0 %v96
    %v98 = vpop.xlane.xlu0 %97
    %v99 = vmax.f32 %v80, %v81
    %100 = vmax.xlane.f32.xlu0 %v99
    %v101 = vpop.xlane.xlu0 %100
    %v102 = vmax.f32 %v82, %v83
    %103 = vmax.xlane.f32.xlu0 %v102
    %v104 = vpop.xlane.xlu0 %103
    %v105 = vmax.f32 %v84, %v85
    %106 = vmax.xlane.f32.xlu0 %v105
    %v107 = vpop.xlane.xlu0 %106
    %v108 = vmax.f32 %v86, %v87
    %109 = vmax.xlane.f32.xlu0 %v108
    %v110 = vpop.xlane.xlu0 %109
    %v111 = vmax.f32 %v88, %v89
    %112 = vmax.xlane.f32.xlu0 %v111
    %v113 = vpop.xlane.xlu0 %112
    %v122 = vlaneseq
    %v123 = vand.u32 %v122, 127
    %v124 = vlaneseq
    %v125 = vshrl.u32 %v124, 7
    %v126 = vsub.s32 %v123, %v125
    %v127 = vrot.slane %v92, %v126
    %v128 = vadd.s32 %v123, 4294967288
    %v129 = vlaneseq
    %v130 = vshrl.u32 %v129, 7
    %v131 = vsub.s32 %v128, %v130
    %v132 = vrot.slane %v95, %v131
    %vm133 = vcmask 130112
    %v134 = vsel %vm133, %v132, %v127
    %v135 = vadd.s32 %v123, 4294967280
    %v136 = vlaneseq
    %v137 = vshrl.u32 %v136, 7
    %v138 = vsub.s32 %v135, %v137
    %v139 = vrot.slane %v98, %v138
    %vm140 = vcmask 195712
    %v141 = vsel %vm140, %v139, %v134
    %v142 = vadd.s32 %v123, 4294967272
    %v143 = vlaneseq
    %v144 = vshrl.u32 %v143, 7
    %v145 = vsub.s32 %v142, %v144
    %v146 = vrot.slane %v101, %v145
    %vm147 = vcmask 261312
    %v148 = vsel %vm147, %v146, %v141
    %v149 = vlaneseq
    %v150 = vshrl.u32 %v149, 7
    %v151 = vsub.s32 %v123, %v150
    %v152 = vrot.slane %v104, %v151
    %v153 = vlaneseq
    %v154 = vshrl.u32 %v153, 7
    %v155 = vsub.s32 %v128, %v154
    %v156 = vrot.slane %v107, %v155
    %v157 = vsel %vm133, %v156, %v152
    %v158 = vlaneseq
    %v159 = vshrl.u32 %v158, 7
    %v160 = vsub.s32 %v135, %v159
    %v161 = vrot.slane %v110, %v160
    %v162 = vsel %vm140, %v161, %v157
    %v163 = vlaneseq
    %v164 = vshrl.u32 %v163, 7
    %v165 = vsub.s32 %v142, %v164
    %v166 = vrot.slane %v113, %v165
    %v167 = vsel %vm147, %v166, %v162
    %vm168 = vcmask 1041409
    %v169 = vsel %vm168, %v167, %v148
    %v171 = vmax.f32 %v73, %v169
    %vm172 = vcmask 254976
    %173 = vst.msk [vmem:[#allocation2] sm:$0x3] %vm172, %v171
    // Predicated region
    $region45: #{visual_base_multi_packed.1} parent=1 // pred_check
      %p174 = pneg %p67
    $region46: #{visual_base_multi_packed.1} parent=1 // pred_check_branch
      %176 = sbr.rel (%p174) target = $region48
    $region47: #{visual_base_multi_packed.1} parent=1 // pred_region
      %v177 = vld [vmem:[#allocation2] sm:$0x3]
      %v178 = vld [vmem:[%s1] sm:$0xff]
      %v179 = vld [vmem:[%s1 + $0x8] sm:$0xff]
      %v180 = vld [vmem:[%s1 + $0x10] sm:$0xff]
      %v181 = vld [vmem:[%s1 + $0x18] sm:$0xff]
      %v182 = vld [vmem:[%s1 + $0x20] sm:$0xff]
      %v183 = vld [vmem:[%s1 + $0x28] sm:$0xff]
      %v184 = vld [vmem:[%s1 + $0x30] sm:$0xff]
      %v185 = vld [vmem:[%s1 + $0x38] sm:$0xff]
      %vm186 = vcmask 523264
      %v187 = vsel %vm186, %v178, -inf
      %188 = vmax.xlane.f32.xlu0 %v187
      %v189 = vpop.xlane.xlu0 %188
      %v190 = vsel %vm186, %v179, -inf
      %191 = vmax.xlane.f32.xlu0 %v190
      %v192 = vpop.xlane.xlu0 %191
      %v193 = vsel %vm186, %v180, -inf
      %194 = vmax.xlane.f32.xlu0 %v193
      %v195 = vpop.xlane.xlu0 %194
      %v196 = vsel %vm186, %v181, -inf
      %197 = vmax.xlane.f32.xlu0 %v196
      %v198 = vpop.xlane.xlu0 %197
      %v199 = vsel %vm186, %v182, -inf
      %200 = vmax.xlane.f32.xlu0 %v199
      %v201 = vpop.xlane.xlu0 %200
      %v202 = vsel %vm186, %v183, -inf
      %203 = vmax.xlane.f32.xlu0 %v202
      %v204 = vpop.xlane.xlu0 %203
      %v205 = vsel %vm186, %v184, -inf
      %206 = vmax.xlane.f32.xlu0 %v205
      %v207 = vpop.xlane.xlu0 %206
      %v208 = vsel %vm186, %v185, -inf
      %209 = vmax.xlane.f32.xlu0 %v208
      %v210 = vpop.xlane.xlu0 %209
      %v211 = vld [vmem:[%s2] sm:$0xff]
      %v212 = vld [vmem:[%s2 + $0x8] sm:$0xff]
      %v213 = vld [vmem:[%s2 + $0x10] sm:$0xff]
      %v214 = vld [vmem:[%s2 + $0x18] sm:$0xff]
      %v215 = vld [vmem:[%s2 + $0x20] sm:$0xff]
      %v216 = vld [vmem:[%s2 + $0x28] sm:$0xff]
      %v217 = vld [vmem:[%s2 + $0x30] sm:$0xff]
      %v218 = vld [vmem:[%s2 + $0x38] sm:$0xff]
      %vm219 = vcmask 130048
      %v220 = vsel %vm219, %v211, -inf
      %221 = vmax.xlane.f32.xlu0 %v220
      %v222 = vpop.xlane.xlu0 %221
      %v223 = vsel %vm219, %v212, -inf
      %224 = vmax.xlane.f32.xlu0 %v223
      %v225 = vpop.xlane.xlu0 %224
      %v226 = vsel %vm219, %v213, -inf
      %227 = vmax.xlane.f32.xlu0 %v226
      %v228 = vpop.xlane.xlu0 %227
      %v229 = vsel %vm219, %v214, -inf
      %230 = vmax.xlane.f32.xlu0 %v229
      %v231 = vpop.xlane.xlu0 %230
      %v232 = vsel %vm219, %v215, -inf
      %233 = vmax.xlane.f32.xlu0 %v232
      %v234 = vpop.xlane.xlu0 %233
      %v235 = vsel %vm219, %v216, -inf
      %236 = vmax.xlane.f32.xlu0 %v235
      %v237 = vpop.xlane.xlu0 %236
      %v238 = vsel %vm219, %v217, -inf
      %239 = vmax.xlane.f32.xlu0 %v238
      %v240 = vpop.xlane.xlu0 %239
      %v241 = vsel %vm219, %v218, -inf
      %242 = vmax.xlane.f32.xlu0 %v241
      %v243 = vpop.xlane.xlu0 %242
      %v244 = vld [vmem:[%s3] sm:$0xff]
      %v245 = vld [vmem:[%s3 + $0x8] sm:$0xff]
      %v246 = vld [vmem:[%s3 + $0x10] sm:$0xff]
      %v247 = vld [vmem:[%s3 + $0x18] sm:$0xff]
      %v248 = vld [vmem:[%s3 + $0x20] sm:$0xff]
      %v249 = vld [vmem:[%s3 + $0x28] sm:$0xff]
      %v250 = vld [vmem:[%s3 + $0x30] sm:$0xff]
      %v251 = vld [vmem:[%s3 + $0x38] sm:$0xff]
      %vm252 = vcmask 31744
      %v253 = vsel %vm252, %v244, -inf
      %254 = vmax.xlane.f32.xlu0 %v253
      %v255 = vpop.xlane.xlu0 %254
      %v256 = vsel %vm252, %v245, -inf
      %257 = vmax.xlane.f32.xlu0 %v256
      %v258 = vpop.xlane.xlu0 %257
      %v259 = vsel %vm252, %v246, -inf
      %260 = vmax.xlane.f32.xlu0 %v259
      %v261 = vpop.xlane.xlu0 %260
      %v262 = vsel %vm252, %v247, -inf
      %263 = vmax.xlane.f32.xlu0 %v262
      %v264 = vpop.xlane.xlu0 %263
      %v265 = vsel %vm252, %v248, -inf
      %266 = vmax.xlane.f32.xlu0 %v265
      %v267 = vpop.xlane.xlu0 %266
      %v268 = vsel %vm252, %v249, -inf
      %269 = vmax.xlane.f32.xlu0 %v268
      %v270 = vpop.xlane.xlu0 %269
      %v271 = vsel %vm252, %v250, -inf
      %272 = vmax.xlane.f32.xlu0 %v271
      %v273 = vpop.xlane.xlu0 %272
      %v274 = vsel %vm252, %v251, -inf
      %275 = vmax.xlane.f32.xlu0 %v274
      %v276 = vpop.xlane.xlu0 %275
      %v285 = vadd.s32 %v123, 4294967264
      %v286 = vlaneseq
      %v287 = vshrl.u32 %v286, 7
      %v288 = vsub.s32 %v285, %v287
      %v289 = vrot.slane %v189, %v288
      %v290 = vadd.s32 %v123, 4294967256
      %v291 = vlaneseq
      %v292 = vshrl.u32 %v291, 7
      %v293 = vsub.s32 %v290, %v292
      %v294 = vrot.slane %v192, %v293
      %vm295 = vcmask 392512
      %v296 = vsel %vm295, %v294, %v289
      %v297 = vadd.s32 %v123, 4294967248
      %v298 = vlaneseq
      %v299 = vshrl.u32 %v298, 7
      %v300 = vsub.s32 %v297, %v299
      %v301 = vrot.slane %v195, %v300
      %vm302 = vcmask 458112
      %v303 = vsel %vm302, %v301, %v296
      %v304 = vadd.s32 %v123, 4294967240
      %v305 = vlaneseq
      %v306 = vshrl.u32 %v305, 7
      %v307 = vsub.s32 %v304, %v306
      %v308 = vrot.slane %v198, %v307
      %vm309 = vcmask 523712
      %v310 = vsel %vm309, %v308, %v303
      %v311 = vlaneseq
      %v312 = vshrl.u32 %v311, 7
      %v313 = vsub.s32 %v285, %v312
      %v314 = vrot.slane %v201, %v313
      %v315 = vlaneseq
      %v316 = vshrl.u32 %v315, 7
      %v317 = vsub.s32 %v290, %v316
      %v318 = vrot.slane %v204, %v317
      %v319 = vsel %vm295, %v318, %v314
      %v320 = vlaneseq
      %v321 = vshrl.u32 %v320, 7
      %v322 = vsub.s32 %v297, %v321
      %v323 = vrot.slane %v207, %v322
      %v324 = vsel %vm302, %v323, %v319
      %v325 = vlaneseq
      %v326 = vshrl.u32 %v325, 7
      %v327 = vsub.s32 %v304, %v326
      %v328 = vrot.slane %v210, %v327
      %v329 = vsel %vm309, %v328, %v324
      %v330 = vsel %vm168, %v329, %v310
      %v340 = vadd.s32 %v123, 4294967232
      %v341 = vlaneseq
      %v342 = vshrl.u32 %v341, 7
      %v343 = vsub.s32 %v340, %v342
      %v344 = vrot.slane %v222, %v343
      %v345 = vadd.s32 %v123, 4294967224
      %v346 = vlaneseq
      %v347 = vshrl.u32 %v346, 7
      %v348 = vsub.s32 %v345, %v347
      %v349 = vrot.slane %v225, %v348
      %vm350 = vcmask 654912
      %v351 = vsel %vm350, %v349, %v344
      %v352 = vadd.s32 %v123, 4294967216
      %v353 = vlaneseq
      %v354 = vshrl.u32 %v353, 7
      %v355 = vsub.s32 %v352, %v354
      %v356 = vrot.slane %v228, %v355
      %vm357 = vcmask 720512
      %v358 = vsel %vm357, %v356, %v351
      %v359 = vadd.s32 %v123, 4294967208
      %v360 = vlaneseq
      %v361 = vshrl.u32 %v360, 7
      %v362 = vsub.s32 %v359, %v361
      %v363 = vrot.slane %v231, %v362
      %vm364 = vcmask 786112
      %v365 = vsel %vm364, %v363, %v358
      %v366 = vlaneseq
      %v367 = vshrl.u32 %v366, 7
      %v368 = vsub.s32 %v340, %v367
      %v369 = vrot.slane %v234, %v368
      %v370 = vlaneseq
      %v371 = vshrl.u32 %v370, 7
      %v372 = vsub.s32 %v345, %v371
      %v373 = vrot.slane %v237, %v372
      %v374 = vsel %vm350, %v373, %v369
      %v375 = vlaneseq
      %v376 = vshrl.u32 %v375, 7
      %v377 = vsub.s32 %v352, %v376
      %v378 = vrot.slane %v240, %v377
      %v379 = vsel %vm357, %v378, %v374
      %v380 = vlaneseq
      %v381 = vshrl.u32 %v380, 7
      %v382 = vsub.s32 %v359, %v381
      %v383 = vrot.slane %v243, %v382
      %v384 = vsel %vm364, %v383, %v379
      %v385 = vsel %vm168, %v384, %v365
      %v395 = vadd.s32 %v123, 4294967200
      %v396 = vlaneseq
      %v397 = vshrl.u32 %v396, 7
      %v398 = vsub.s32 %v395, %v397
      %v399 = vrot.slane %v255, %v398
      %v400 = vadd.s32 %v123, 4294967192
      %v401 = vlaneseq
      %v402 = vshrl.u32 %v401, 7
      %v403 = vsub.s32 %v400, %v402
      %v404 = vrot.slane %v258, %v403
      %vm405 = vcmask 917312
      %v406 = vsel %vm405, %v404, %v399
      %v407 = vadd.s32 %v123, 4294967184
      %v408 = vlaneseq
      %v409 = vshrl.u32 %v408, 7
      %v410 = vsub.s32 %v407, %v409
      %v411 = vrot.slane %v261, %v410
      %vm412 = vcmask 982912
      %v413 = vsel %vm412, %v411, %v406
      %v414 = vadd.s32 %v123, 4294967176
      %v415 = vlaneseq
      %v416 = vshrl.u32 %v415, 7
      %v417 = vsub.s32 %v414, %v416
      %v418 = vrot.slane %v264, %v417
      %vm419 = vcmask 1048512
      %v420 = vsel %vm419, %v418, %v413
      %v421 = vlaneseq
      %v422 = vshrl.u32 %v421, 7
      %v423 = vsub.s32 %v395, %v422
      %v424 = vrot.slane %v267, %v423
      %v425 = vlaneseq
      %v426 = vshrl.u32 %v425, 7
      %v427 = vsub.s32 %v400, %v426
      %v428 = vrot.slane %v270, %v427
      %v429 = vsel %vm405, %v428, %v424
      %v430 = vlaneseq
      %v431 = vshrl.u32 %v430, 7
      %v432 = vsub.s32 %v407, %v431
      %v433 = vrot.slane %v273, %v432
      %v434 = vsel %vm412, %v433, %v429
      %v435 = vlaneseq
      %v436 = vshrl.u32 %v435, 7
      %v437 = vsub.s32 %v414, %v436
      %v438 = vrot.slane %v276, %v437
      %v439 = vsel %vm419, %v438, %v434
      %v440 = vsel %vm168, %v439, %v420
      %vm442 = vcmask 261120
      %v443 = vsel %vm442, %v177, %v330
      %v444 = vsel %vm186, %v443, %v385
      %vm445 = vcmask 785408
      %v446 = vsel %vm445, %v444, %v440
      %447 = vst [vmem:[#allocation4] sm:$0x3] %v446
    $region48: #{visual_base_multi_packed.1} parent=1 // pred_fallthru
      _
    // Predicated region
    $region49: #{visual_base_multi_packed.1} parent=1 // pred_check
      _
    $region50: #{visual_base_multi_packed.1} parent=1 // pred_check_branch
      %449 = sbr.rel (0) target = $region52
    $region51: #{visual_base_multi_packed.1} parent=1 // pred_region
      %s451 = ssub.s32 32, 32
      %452 = vsyncadd [#allocation5], %s451
      %s454 = sshll.u32 [#allocation4], 4
      %s455 = int_to_ptr.vmem [resolvable:$true] %s454
      %457 = dma.vmem_to_hbm [thread:$0]  %s455, 32, %s4, [#allocation5]
    $region52: #{visual_base_multi_packed.1} parent=1 // pred_fallthru
      _
    // Predicated region
    $region53: #{visual_base_multi_packed.1} parent=1 // pred_check
      _
    $region54: #{visual_base_multi_packed.1} parent=1 // pred_check_branch
      %459 = sbr.rel (0) target = $region56
    $region55: #{visual_base_multi_packed.1} parent=1 // pred_region
      %460 = dma.done [#allocation5], 32
    $region56: #{visual_base_multi_packed.1} parent=1 // pred_fallthru
      _
    %461 = vsyncpa [#allocation5], 1

</llo_original>
